<compile_context>
chip_gen: v7x
topology: tpu7x:2x2x1
jax: 0.10.0
libtpu: 0.0.40
codegen_flags: <defaults>
</compile_context>

<pallas_src>
import jax
import jax.numpy as jnp
from jax.experimental import pallas as pl
from jax.experimental.pallas import tpu as pltpu


def _mc_linear_kernel(x_ref, w_ref, bias_ref, out_ref):
    # Single block-diagonal MXU matmul producing the fused (B, 2*OUT) result.
    acc = jnp.dot(x_ref[...], w_ref[...], preferred_element_type=jnp.float32)
    # Fused bias + ReLU in f32, one cast/store (lane-dense when 2*OUT % 128==0).
    out_ref[...] = jnp.maximum(acc + bias_ref[...], 0.0).astype(out_ref.dtype)


def pack_params(color_w, bright_w, color_bias, bright_bias):
    """One-time packing of MultiChannelLinear params (call at init, not per step).

    Returns:
      w_bd:    (2*IN, 2*OUT) block-diagonal weight, ready for x_all @ w_bd.
      bias_all:(1, 2*OUT) fused bias row.
    """
    out_f, in_f = color_w.shape
    w_bd = jnp.zeros((2 * in_f, 2 * out_f), dtype=color_w.dtype)
    w_bd = w_bd.at[:in_f, :out_f].set(jnp.transpose(color_w))
    w_bd = w_bd.at[in_f:, out_f:].set(jnp.transpose(bright_w))
    bias_all = jnp.concatenate([color_bias, bright_bias]).reshape(1, 2 * out_f)
    return w_bd, bias_all


def multi_channel_linear_fused(x_all, w_bd, bias_all):
    """Fused forward: x_all (B, 2*IN) -> relu(x_all @ w_bd + bias) (B, 2*OUT).

    Prefer keeping the fused lane-dense slab downstream; slice only at the
    final consumer (slicing the lane dim at 64 re-introduces masked vregs).
    """
    B = x_all.shape[0]
    N = w_bd.shape[1]

    vmem = pl.BlockSpec(memory_space=pltpu.MemorySpace.VMEM)

    return pl.pallas_call(
        _mc_linear_kernel,
        out_shape=jax.ShapeDtypeStruct((B, N), x_all.dtype),
        in_specs=[vmem, vmem, vmem],
        out_specs=vmem,
    )(x_all, w_bd, bias_all)


def multi_channel_linear(color_x, bright_x, w_bd, bias_all):
    """Compatibility wrapper matching MultiChannelLinear.forward's (c, b) tuple.

    Packs the two activations into one (B, 2*IN) slab (ideally the producer
    already emits them adjacent) and slices the fused output at the boundary.
    """
    out_f = w_bd.shape[1] // 2
    x_all = jnp.concatenate([color_x, bright_x], axis=-1)
    fused = multi_channel_linear_fused(x_all, w_bd, bias_all)
    return fused[:, :out_f], fused[:, out_f:]


if __name__ == "__main__":
    # Small shapes consistent with the module: batch=8, in=32, out=64.
    batch, in_features, out_features = 8, 32, 64

    key = jax.random.PRNGKey(0)
    k_xc, k_xb, k_wc, k_wb = jax.random.split(key, 4)

    color_x = jax.random.normal(k_xc, (batch, in_features), dtype=jnp.float32)
    bright_x = jax.random.normal(k_xb, (batch, in_features), dtype=jnp.float32)

    # Deterministic param init mirroring torch.randn(...)*0.01 / zeros bias.
    color_w = jax.random.normal(k_wc, (out_features, in_features),
                                dtype=jnp.float32) * 0.01
    bright_w = jax.random.normal(k_wb, (out_features, in_features),
                                 dtype=jnp.float32) * 0.01
    color_bias = jnp.zeros((out_features,), dtype=jnp.float32)
    bright_bias = jnp.zeros((out_features,), dtype=jnp.float32)

    # One-time packing (parameter-init time, not per forward).
    w_bd, bias_all = pack_params(color_w, bright_w, color_bias, bright_bias)
    jax.block_until_ready((w_bd, bias_all))

    out_c, out_b = multi_channel_linear(color_x, bright_x, w_bd, bias_all)
    jax.block_until_ready((out_c, out_b))

    # Reference check in plain JAX (same semantics as F.linear + ReLU).
    ref_c = jnp.maximum(color_x @ color_w.T + color_bias, 0.0)
    ref_b = jnp.maximum(bright_x @ bright_w.T + bright_bias, 0.0)
    assert jnp.allclose(out_c, ref_c, atol=1e-5), "color branch mismatch"
    assert jnp.allclose(out_b, ref_b, atol=1e-5), "brightness branch mismatch"

    print("KERNEL_OK")
</pallas_src>

<mosaic_0001>
module attributes {stable_mosaic.version = 11 : i64} {
  func.func @_mc_linear_kernel(%arg0: memref<8x64xf32, #tpu.memory_space<vmem>>, %arg1: memref<64x128xf32, #tpu.memory_space<vmem>>, %arg2: memref<1x128xf32, #tpu.memory_space<vmem>>, %arg3: memref<8x128xf32, #tpu.memory_space<vmem>>) attributes {dimension_semantics = [], scalar_prefetch = 0 : i64, scratch_operands = 0 : i64, tpu.core_type = #tpu.core_type<tc>} {
    %c0 = arith.constant 0 : index
    %c0_0 = arith.constant 0 : index
    %0 = vector.load %arg0[%c0, %c0_0] : memref<8x64xf32, #tpu.memory_space<vmem>>, vector<8x64xf32>
    %c0_1 = arith.constant 0 : index
    %c0_2 = arith.constant 0 : index
    %1 = vector.load %arg1[%c0_1, %c0_2] : memref<64x128xf32, #tpu.memory_space<vmem>>, vector<64x128xf32>
    %cst = arith.constant dense<0.000000e+00> : vector<8x128xf32>
    %2 = tpu.matmul %0, %1, %cst {dimension_numbers = #tpu.dot_dimension_numbers<[1], [0], [0], [1], [0, 0, 1, 1], [], []>} : vector<8x64xf32>, vector<64x128xf32>, vector<8x128xf32> -> vector<8x128xf32>
    %c0_3 = arith.constant 0 : index
    %c0_4 = arith.constant 0 : index
    %3 = vector.load %arg2[%c0_3, %c0_4] : memref<1x128xf32, #tpu.memory_space<vmem>>, vector<1x128xf32>
    %4 = vector.broadcast %3 : vector<1x128xf32> to vector<8x128xf32>
    %5 = arith.addf %2, %4 : vector<8x128xf32>
    %cst_5 = arith.constant 0.000000e+00 : f32
    %6 = vector.broadcast %cst_5 : f32 to vector<8x128xf32>
    %7 = arith.maximumf %5, %6 : vector<8x128xf32>
    %c0_6 = arith.constant 0 : index
    %c0_7 = arith.constant 0 : index
    %8 = vector.load %arg3[%c0_6, %c0_7] : memref<8x128xf32, #tpu.memory_space<vmem>>, vector<8x128xf32>
    tpu.vector_store %arg3[%c0_6, %c0_7], %7 {strides = array<i32>} : memref<8x128xf32, #tpu.memory_space<vmem>>, vector<8x128xf32>,
    return
  }
}

</mosaic_0001>

<llo_original>
// kernel: tpu_custom_call.1
$region0: #{tpu_custom_call.1}
  #allocation0 [shape = 'u32[]', space=smem, size = 0x4, offset = 0x4, fixed_abs, tag = 'smem constant byte address 0x4 - core index']
  #allocation1 [shape = 'u32[144,128]{1,0:T(1,128)}', space=vmem, size = 0x12000, scoped, tag = 'internal scratch']
  %s0 = inlined_call_operand.hbm [shape: f32[8,64], index: 0, kind: input, shape index: {}]
  %s1 = inlined_call_operand.hbm [shape: f32[64,128], index: 1, kind: input, shape index: {}]
  %s2 = inlined_call_operand.vmem [shape: f32[1,128], index: 2, kind: input, shape index: {}]
  %s3 = inlined_call_operand.hbm [shape: f32[8,128], index: 3, kind: output, shape index: {}]
  %s4 = sld [smem:[#allocation0]]
  $region30: #{tpu_custom_call.1} parent=0
    _
  %s6 = ssub.s32 1, %s4
  %s7 = scalar_select 0, %s6, %s4
  $region1: #{tpu_custom_call.1} parent=0
    #allocation2 [shape = 'u8[4096]{0}', space=vmem, size = 0x1000, scoped, tag = 'input window, operand 0, single buffered']
    #allocation3 [shape = 's32[1]{0}', space=sflag, size = 0x4, scoped, tag = 'scoped memory for tpu_custom_call.1']
    #allocation4 [shape = 's32[1]{0}', space=sflag, size = 0x4, scoped, tag = 'scoped memory for tpu_custom_call.1']
    #allocation5 [shape = 'u8[32768]{0}', space=vmem, size = 0x8000, scoped, tag = 'input window, operand 1, single buffered']
    #allocation6 [shape = 's32[1]{0}', space=sflag, size = 0x4, scoped, tag = 'scoped memory for tpu_custom_call.1']
    #allocation7 [shape = 'u8[4096]{0}', space=vmem, size = 0x1000, scoped, tag = 'output window, operand 0, single buffered']
    %8 = vsyncpa [#allocation3], 0
    %9 = vsyncpa [#allocation6], 0
    %10 = vsyncpa [#allocation4], 0
    // Predicated region
    $region2: #{tpu_custom_call.1} parent=1 // pred_check
      _
    $region3: #{tpu_custom_call.1} parent=1 // pred_check_branch
      %12 = sbr.rel (0) target = $region5
    $region4: #{tpu_custom_call.1} parent=1 // pred_region
      %s14 = ssub.s32 128, 128
      %15 = vsyncadd [#allocation3], %s14
      %s17 = sshll.u32 [#allocation2], 4
      %s18 = int_to_ptr.vmem [resolvable:$true] %s17
      %20 = dma.hbm_to_vmem [thread:$0]  %s0, 128, %s18, [#allocation3]
    $region5: #{tpu_custom_call.1} parent=1 // pred_fallthru
      _
    // Predicated region
    $region6: #{tpu_custom_call.1} parent=1 // pred_check
      _
    $region7: #{tpu_custom_call.1} parent=1 // pred_check_branch
      %22 = sbr.rel (0) target = $region9
    $region8: #{tpu_custom_call.1} parent=1 // pred_region
      %s24 = ssub.s32 1024, 1024
      %25 = vsyncadd [#allocation6], %s24
      %s26 = sshll.u32 [#allocation5], 4
      %s27 = int_to_ptr.vmem [resolvable:$true] %s26
      %32 = dma.hbm_to_vmem [thread:$0]  %s1, 1024, %s27, [#allocation6], 128, 128, 8
    $region9: #{tpu_custom_call.1} parent=1 // pred_fallthru
      _
    // Predicated region
    $region10: #{tpu_custom_call.1} parent=1 // pred_check
      _
    $region11: #{tpu_custom_call.1} parent=1 // pred_check_branch
      %34 = sbr.rel (0) target = $region13
    $region12: #{tpu_custom_call.1} parent=1 // pred_region
      _
    $region13: #{tpu_custom_call.1} parent=1 // pred_fallthru
      _
    // Predicated region
    $region14: #{tpu_custom_call.1} parent=1 // pred_check
      _
    $region15: #{tpu_custom_call.1} parent=1 // pred_check_branch
      %36 = sbr.rel (0) target = $region17
    $region16: #{tpu_custom_call.1} parent=1 // pred_region
      %37 = dma.done [#allocation3], 128
    $region17: #{tpu_custom_call.1} parent=1 // pred_fallthru
      _
    // Predicated region
    $region18: #{tpu_custom_call.1} parent=1 // pred_check
      _
    $region19: #{tpu_custom_call.1} parent=1 // pred_check_branch
      %39 = sbr.rel (0) target = $region21
    $region20: #{tpu_custom_call.1} parent=1 // pred_region
      %40 = dma.done [#allocation6], 1024
    $region21: #{tpu_custom_call.1} parent=1 // pred_fallthru
      _
    %v41 = vld [vmem:[#allocation2] sm:$0xff]
    %v42 = vld [vmem:[#allocation5] sm:$0xff]
    %v43 = vld [vmem:[#allocation5 + $0x8] sm:$0xff]
    %v44 = vld [vmem:[#allocation5 + $0x10] sm:$0xff]
    %v45 = vld [vmem:[#allocation5 + $0x18] sm:$0xff]
    %v46 = vld [vmem:[#allocation5 + $0x20] sm:$0xff]
    %v47 = vld [vmem:[#allocation5 + $0x28] sm:$0xff]
    %v48 = vld [vmem:[#allocation5 + $0x30] sm:$0xff]
    %v49 = vld [vmem:[#allocation5 + $0x38] sm:$0xff]
    %v50 = vld [vmem:[%s2] sm:$0x1]
    %v52 = vlaneseq
    %v53 = vshrl.u32 %v52, 7
    %v54 = vsub.s32 0, %v53
    %v55 = vrot.slane %v50, %v54
    %vm57 = vcmask 523264
    %v59 = vsel %vm57, %v41, 0
    %61 = vmatprep.subr.mxu0 0.0
    %62 = vmatpush1.msra.mxu0 %v42
    %63 = vmatprep.subr.mxu0 0.0
    %64 = vmatpush1.msra.mxu0 %v43
    %65 = vmatprep.subr.mxu0 0.0
    %66 = vmatpush1.msra.mxu0 %v44
    %67 = vmatprep.subr.mxu0 0.0
    %68 = vmatpush1.msra.mxu0 %v45
    %69 = vmatprep.subr.mxu0 0.0
    %70 = vmatpush1.msra.mxu0 %v46
    %71 = vmatprep.subr.mxu0 0.0
    %72 = vmatpush1.msra.mxu0 %v47
    %73 = vmatprep.subr.mxu0 0.0
    %74 = vmatpush1.msra.mxu0 %v48
    %75 = vmatprep.subr.mxu0 0.0
    %76 = vmatpush1.msra.mxu0 %v49
    %77 = vmatprep.subr.mxu0 0.0
    %78 = vmatpush1.msra.mxu0 0.0
    %79 = vmatprep.subr.mxu0 0.0
    %80 = vmatpush1.msra.mxu0 0.0
    %81 = vmatprep.subr.mxu0 0.0
    %82 = vmatpush1.msra.mxu0 0.0
    %83 = vmatprep.subr.mxu0 0.0
    %84 = vmatpush1.msra.mxu0 0.0
    %85 = vmatprep.subr.mxu0 0.0
    %86 = vmatpush1.msra.mxu0 0.0
    %87 = vmatprep.subr.mxu0 0.0
    %88 = vmatpush1.msra.mxu0 0.0
    %89 = vmatprep.subr.mxu0 0.0
    %90 = vmatpush1.msra.mxu0 0.0
    %91 = vmatprep.subr.mxu0 0.0
    %92 = vmatpush1.msra.mxu0 0.0
    %93 = vmatprep.subr.mxu0 0.0
    %94 = vmatpush1.msra.mxu0 0.0
    %95 = vmatprep.subr.mxu0 0.0
    %96 = vmatpush1.msra.mxu0 0.0
    %97 = vmatprep.subr.mxu0 0.0
    %98 = vmatpush1.msra.mxu0 0.0
    %99 = vmatprep.subr.mxu0 0.0
    %100 = vmatpush1.msra.mxu0 0.0
    %101 = vmatprep.subr.mxu0 0.0
    %102 = vmatpush1.msra.mxu0 0.0
    %103 = vmatprep.subr.mxu0 0.0
    %104 = vmatpush1.msra.mxu0 0.0
    %105 = vmatprep.subr.mxu0 0.0
    %106 = vmatpush1.msra.mxu0 0.0
    %107 = vmatprep.subr.mxu0 0.0
    %108 = vmatpush1.msra.mxu0 0.0
    %109 = vmatprep.subr.mxu0 0.0
    %110 = vmatpush1.msra.mxu0 0.0
    %111 = vmatprep.subr.mxu0 0.0
    %112 = vmatpush1.msra.mxu0 0.0
    %113 = vmatprep.subr.mxu0 0.0
    %114 = vmatpush1.msra.mxu0 0.0
    %115 = vmatprep.subr.mxu0 0.0
    %116 = vmatpush1.msra.mxu0 0.0
    %117 = vmatprep.subr.mxu0 0.0
    %118 = vmatpush1.msra.mxu0 0.0
    %119 = vmatprep.subr.mxu0 0.0
    %120 = vmatpush1.msra.mxu0 0.0
    %121 = vmatprep.subr.mxu0 0.0
    %122 = vmatpush1.msra.mxu0 0.0
    %123 = vmatprep.subr.mxu0 0.0
    %124 = vmatpush1.msra.mxu0 0.0
    %125 = vmatprep.mubr.f32.mxu0 0.0
    %126 = vmatmul.mubr.f32.gmra.mrb[0].mxu0 %v59
    %v127 = vpop.f32.mrb[0].mxu0
    %v128 = vadd.f32 %v55, %v127
    %v129 = vpop.f32.mrb[0].mxu0
    %130 = vdwg.mxu0
    %v131 = vmax.f32 %v128, 0.0
    %132 = vst [vmem:[#allocation7] sm:$0xff] %v131
    // Predicated region
    $region22: #{tpu_custom_call.1} parent=1 // pred_check
      _
    $region23: #{tpu_custom_call.1} parent=1 // pred_check_branch
      %134 = sbr.rel (0) target = $region25
    $region24: #{tpu_custom_call.1} parent=1 // pred_region
      %s136 = ssub.s32 128, 128
      %137 = vsyncadd [#allocation4], %s136
      %s139 = sshll.u32 [#allocation7], 4
      %s140 = int_to_ptr.vmem [resolvable:$true] %s139
      %142 = dma.vmem_to_hbm [thread:$0]  %s140, 128, %s3, [#allocation4]
    $region25: #{tpu_custom_call.1} parent=1 // pred_fallthru
      _
    // Predicated region
    $region26: #{tpu_custom_call.1} parent=1 // pred_check
      _
    $region27: #{tpu_custom_call.1} parent=1 // pred_check_branch
      %144 = sbr.rel (0) target = $region29
    $region28: #{tpu_custom_call.1} parent=1 // pred_region
      %145 = dma.done [#allocation4], 128
    $region29: #{tpu_custom_call.1} parent=1 // pred_fallthru
      _
    %146 = vsyncpa [#allocation3], 1
    %147 = vsyncpa [#allocation6], 1
    %148 = vsyncpa [#allocation4], 1

</llo_original>
